<compile_context>
chip_gen: v6e
topology: v6e:2x2x1
jax: 0.10.0
libtpu: 0.0.40
codegen_flags: <defaults>
</compile_context>

<pallas_src>
import jax
import jax.numpy as jnp
from jax.experimental import pallas as pl
from jax.experimental.pallas import tpu as pltpu

LANE = 128       # lane quantum (fast axis; boxes map here)
SUB = 8          # sublane quantum
MAX_ROWS = 512   # rows of 128 boxes per grid step -> 65536 boxes / step


def _round_up(x, m):
    return ((x + m - 1) // m) * m


def _iouwh_kernel(wh_ref, out_ref):
    # wh_ref: (4, R, 128) VMEM tile, rows = [pred_w, pred_h, tgt_w, tgt_h]
    # out_ref: (R, 128) per-box loss tile
    pw = wh_ref[0].astype(jnp.float32)
    ph = wh_ref[1].astype(jnp.float32)
    tw = wh_ref[2].astype(jnp.float32)
    th = wh_ref[3].astype(jnp.float32)

    # With target centers zeroed: (br - tl) == min(pred_wh, target_wh),
    # intersection enabled only when both overlaps are strictly positive.
    iw = jnp.minimum(pw, tw)
    ih = jnp.minimum(ph, th)
    area_i = jnp.where((iw > 0.0) & (ih > 0.0), iw * ih, 0.0)

    area_p = pw * ph
    area_g = tw * th
    U = area_p + area_g - area_i + 1e-16
    iou = area_i * pl.reciprocal(U)       # exact 1/x on the EUP slot
    loss = 1.0 - iou * iou

    out_ref[...] = loss.astype(out_ref.dtype)


def iouwh_loss(pred, target, reduction="none"):
    """Pallas implementation of IOUWH_loss.forward.

    pred/target: arrays whose total size is a multiple of 4 (boxes
    [cx, cy, w, h] along the last dim). Returns per-box loss of shape (N,)
    for reduction='none'.
    """
    dtype = pred.dtype

    p = pred.reshape(-1, 4)
    t = target.reshape(-1, 4)
    n = p.shape[0]

    # One stacked component-major slab (4, N): rows [pw, ph, tw, th].
    # Single wrapper-side fusion, single per-step DMA into the kernel.
    wh = jnp.concatenate([p[:, 2:4].T, t[:, 2:4].T], axis=0)

    # Sublane-dense tiling: boxes -> rows of 128 lanes, rows in chunks of 8.
    n_rows_min = _round_up(pl.cdiv(n, LANE), SUB)
    if n_rows_min <= SUB:
        rows = n_rows_min                                   # single tiny step
    else:
        # Guarantee >= 2 grid steps (both v7x TensorCores busy), cap per-step
        # work at MAX_ROWS rows (64Ki boxes, ~2.5 MiB VMEM double-buffered).
        rows = min(MAX_ROWS, _round_up(pl.cdiv(n_rows_min, 2), SUB))
    grid_len = pl.cdiv(n_rows_min, rows)
    n_rows = grid_len * rows
    n_pad = n_rows * LANE

    if n_pad != n:
        # Pad boxes get w=h=1 -> finite loss, sliced off below.
        wh = jnp.pad(wh, ((0, 0), (0, n_pad - n)), constant_values=1.0)
    wh = wh.reshape(4, n_rows, LANE)

    out = pl.pallas_call(
        _iouwh_kernel,
        out_shape=jax.ShapeDtypeStruct((n_rows, LANE), dtype),
        grid=(grid_len,),
        in_specs=[pl.BlockSpec((4, rows, LANE), lambda i: (0, i, 0))],
        out_specs=pl.BlockSpec((rows, LANE), lambda i: (i, 0)),
        compiler_params=pltpu.CompilerParams(
            dimension_semantics=("parallel",)),
    )(wh)

    loss = out.reshape(-1)[:n]      # drop padding BEFORE any reduction
    if reduction == "mean":
        return loss.mean()
    elif reduction == "sum":
        return loss.sum()
    return loss


def _reference_iouwh(pred, target):
    """Pure-JAX reference mirroring the PyTorch forward (reduction='none')."""
    pred = pred.reshape(-1, 4)
    target = target.reshape(-1, 4)
    target = target.at[:, :2].set(0.0)
    tl = jnp.maximum(target[:, :2] - pred[:, 2:] / 2,
                     target[:, :2] - target[:, 2:] / 2)
    br = jnp.minimum(target[:, :2] + pred[:, 2:] / 2,
                     target[:, :2] + target[:, 2:] / 2)
    area_p = jnp.prod(pred[:, 2:], axis=1)
    area_g = jnp.prod(target[:, 2:], axis=1)
    en = jnp.prod((tl < br).astype(tl.dtype), axis=1)
    area_i = jnp.prod(br - tl, axis=1) * en
    U = area_p + area_g - area_i + 1e-16
    iou = area_i / U
    return 1.0 - iou ** 2


def _make_boxes(key, batch, num_boxes):
    k1, k2 = jax.random.split(key)
    xy = jax.random.uniform(k1, (batch, num_boxes, 2), minval=-1.0, maxval=1.0)
    wh = jax.random.uniform(k2, (batch, num_boxes, 2), minval=0.1, maxval=2.0)
    return jnp.concatenate([xy, wh], axis=-1).astype(jnp.float32)


if __name__ == "__main__":
    key = jax.random.PRNGKey(0)
    kp, kt, kp2, kt2, kp3, kt3 = jax.random.split(key, 6)

    # Case 1: small shape consistent with the module (batch=2, boxes=64) -> N=128
    batch, num_boxes = 2, 64
    pred = _make_boxes(kp, batch, num_boxes)
    target = _make_boxes(kt, batch, num_boxes)
    loss = jax.block_until_ready(iouwh_loss(pred, target, reduction="none"))
    ref = _reference_iouwh(pred, target)
    assert loss.shape == (batch * num_boxes,)
    assert jnp.allclose(loss, ref, atol=1e-5, rtol=1e-5), (
        float(jnp.max(jnp.abs(loss - ref))))

    # Case 2: ragged box count (exercises tail padding), N=150
    pred2 = _make_boxes(kp2, 3, 50)
    target2 = _make_boxes(kt2, 3, 50)
    loss2 = jax.block_until_ready(iouwh_loss(pred2, target2, reduction="none"))
    ref2 = _reference_iouwh(pred2, target2)
    assert loss2.shape == (150,)
    assert jnp.allclose(loss2, ref2, atol=1e-5, rtol=1e-5), (
        float(jnp.max(jnp.abs(loss2 - ref2))))

    # Case 3: multi-step grid path (>=2 parallel steps), N=2400
    pred3 = _make_boxes(kp3, 4, 600)
    target3 = _make_boxes(kt3, 4, 600)
    loss3 = jax.block_until_ready(iouwh_loss(pred3, target3, reduction="none"))
    ref3 = _reference_iouwh(pred3, target3)
    assert loss3.shape == (2400,)
    assert jnp.allclose(loss3, ref3, atol=1e-5, rtol=1e-5), (
        float(jnp.max(jnp.abs(loss3 - ref3))))

    print("KERNEL_OK")
</pallas_src>

<mosaic_0001>
module attributes {stable_mosaic.version = 11 : i64} {
  func.func @_iouwh_kernel(%arg0: i32, %arg1: memref<4x8x128xf32, #tpu.memory_space<vmem>>, %arg2: memref<8x128xf32, #tpu.memory_space<vmem>>) attributes {dimension_semantics = [#tpu.dimension_semantics<parallel>], iteration_bounds = array<i64: 1>, scalar_prefetch = 0 : i64, scratch_operands = 0 : i64, tpu.core_type = #tpu.core_type<tc>, window_params = [{transform_indices = @transform_0, window_bounds = array<i64: 4, 8, 128>}, {transform_indices = @transform_1, window_bounds = array<i64: 8, 128>}]} {
    %c0 = arith.constant 0 : index
    %c0_0 = arith.constant 0 : index
    %c0_1 = arith.constant 0 : index
    %0 = vector.load %arg1[%c0, %c0_0, %c0_1] : memref<4x8x128xf32, #tpu.memory_space<vmem>>, vector<1x8x128xf32>
    %1 = vector.shape_cast %0 : vector<1x8x128xf32> to vector<8x128xf32>
    %c1 = arith.constant 1 : index
    %c0_2 = arith.constant 0 : index
    %c0_3 = arith.constant 0 : index
    %2 = vector.load %arg1[%c1, %c0_2, %c0_3] : memref<4x8x128xf32, #tpu.memory_space<vmem>>, vector<1x8x128xf32>
    %3 = vector.shape_cast %2 : vector<1x8x128xf32> to vector<8x128xf32>
    %c2 = arith.constant 2 : index
    %c0_4 = arith.constant 0 : index
    %c0_5 = arith.constant 0 : index
    %4 = vector.load %arg1[%c2, %c0_4, %c0_5] : memref<4x8x128xf32, #tpu.memory_space<vmem>>, vector<1x8x128xf32>
    %5 = vector.shape_cast %4 : vector<1x8x128xf32> to vector<8x128xf32>
    %c3 = arith.constant 3 : index
    %c0_6 = arith.constant 0 : index
    %c0_7 = arith.constant 0 : index
    %6 = vector.load %arg1[%c3, %c0_6, %c0_7] : memref<4x8x128xf32, #tpu.memory_space<vmem>>, vector<1x8x128xf32>
    %7 = vector.shape_cast %6 : vector<1x8x128xf32> to vector<8x128xf32>
    %8 = arith.minimumf %1, %5 : vector<8x128xf32>
    %9 = arith.minimumf %3, %7 : vector<8x128xf32>
    %cst = arith.constant 0.000000e+00 : f32
    %10 = vector.broadcast %cst : f32 to vector<8x128xf32>
    %11 = arith.cmpf ogt, %8, %10 : vector<8x128xf32>
    %cst_8 = arith.constant 0.000000e+00 : f32
    %12 = vector.broadcast %cst_8 : f32 to vector<8x128xf32>
    %13 = arith.cmpf ogt, %9, %12 : vector<8x128xf32>
    %14 = arith.andi %11, %13 : vector<8x128xi1>
    %15 = arith.mulf %8, %9 : vector<8x128xf32>
    %cst_9 = arith.constant 0.000000e+00 : f32
    %16 = vector.broadcast %cst_9 : f32 to vector<8x128xf32>
    %17 = arith.select %14, %15, %16 : vector<8x128xi1>, vector<8x128xf32>
    %18 = arith.mulf %1, %3 : vector<8x128xf32>
    %19 = arith.mulf %5, %7 : vector<8x128xf32>
    %20 = arith.addf %18, %19 : vector<8x128xf32>
    %21 = arith.subf %20, %17 : vector<8x128xf32>
    %cst_10 = arith.constant 1.000000e-16 : f32
    %22 = vector.broadcast %cst_10 : f32 to vector<8x128xf32>
    %23 = arith.addf %21, %22 : vector<8x128xf32>
    %24 = tpu.reciprocal %23 : vector<8x128xf32> -> vector<8x128xf32>
    %25 = arith.mulf %17, %24 : vector<8x128xf32>
    %26 = arith.mulf %25, %25 : vector<8x128xf32>
    %cst_11 = arith.constant 1.000000e+00 : f32
    %27 = vector.broadcast %cst_11 : f32 to vector<8x128xf32>
    %28 = arith.subf %27, %26 : vector<8x128xf32>
    %c0_12 = arith.constant 0 : index
    %c0_13 = arith.constant 0 : index
    %29 = vector.load %arg2[%c0_12, %c0_13] : memref<8x128xf32, #tpu.memory_space<vmem>>, vector<8x128xf32>
    tpu.vector_store %arg2[%c0_12, %c0_13], %28 {strides = array<i32>} : memref<8x128xf32, #tpu.memory_space<vmem>>, vector<8x128xf32>,
    return
  }
  func.func @transform_0(%arg0: i32) -> (i32, i32, i32) {
    %c0_i32 = arith.constant 0 : i32
    %c0_i32_0 = arith.constant 0 : i32
    %c0_i32_1 = arith.constant 0 : i32
    return %c0_i32, %arg0, %c0_i32_0 : i32, i32, i32
  }
  func.func @transform_1(%arg0: i32) -> (i32, i32) {
    %c0_i32 = arith.constant 0 : i32
    %c0_i32_0 = arith.constant 0 : i32
    return %arg0, %c0_i32 : i32, i32
  }
}

</mosaic_0001>

<llo_original>
// kernel: tpu_custom_call.1
$region0: #{tpu_custom_call.1}
  #allocation0 [shape = 'u32[]', space=smem, size = 0x4, offset = 0x4, fixed_abs, tag = 'smem constant byte address 0x4 - core index']
  #allocation1 [shape = 'u32[144,128]{1,0:T(1,128)}', space=vmem, size = 0x12000, scoped, tag = 'internal scratch']
  %s0 = inlined_call_operand.hbm [shape: f32[4,8,128], index: 0, kind: input, shape index: {}]
  %s1 = inlined_call_operand.hbm [shape: f32[8,128], index: 1, kind: output, shape index: {}]
  %s2 = sld [smem:[#allocation0]]
  $region18: #{tpu_custom_call.1} parent=0
    _
  %s4 = ssub.s32 1, %s2
  %s5 = scalar_select 0, %s4, %s2
  $region1: #{tpu_custom_call.1} parent=0
    #allocation2 [shape = 'u8[16384]{0}', space=vmem, size = 0x4000, scoped, tag = 'input window, operand 0, single buffered']
    #allocation3 [shape = 's32[1]{0}', space=sflag, size = 0x4, scoped, tag = 'scoped memory for tpu_custom_call.1']
    #allocation4 [shape = 's32[1]{0}', space=sflag, size = 0x4, scoped, tag = 'scoped memory for tpu_custom_call.1']
    #allocation5 [shape = 'u8[4096]{0}', space=vmem, size = 0x1000, scoped, tag = 'output window, operand 0, single buffered']
    %6 = vsyncpa [#allocation3], 0
    %7 = vsyncpa [#allocation4], 0
    // Predicated region
    $region2: #{tpu_custom_call.1} parent=1 // pred_check
      _
    $region3: #{tpu_custom_call.1} parent=1 // pred_check_branch
      %9 = sbr.rel (0) target = $region5
    $region4: #{tpu_custom_call.1} parent=1 // pred_region
      %s11 = ssub.s32 512, 512
      %12 = vsyncadd [#allocation3], %s11
      %s13 = sshll.u32 [#allocation2], 4
      %s14 = int_to_ptr.vmem [resolvable:$true] %s13
      %19 = dma.hbm_to_vmem [thread:$0]  %s0, 512, %s14, [#allocation3], 128, 128, 8
    $region5: #{tpu_custom_call.1} parent=1 // pred_fallthru
      _
    // Predicated region
    $region6: #{tpu_custom_call.1} parent=1 // pred_check
      _
    $region7: #{tpu_custom_call.1} parent=1 // pred_check_branch
      %21 = sbr.rel (0) target = $region9
    $region8: #{tpu_custom_call.1} parent=1 // pred_region
      %22 = dma.done [#allocation3], 512
    $region9: #{tpu_custom_call.1} parent=1 // pred_fallthru
      _
    %v23 = vld [vmem:[#allocation2] sm:$0xff]
    %s24 = scalar_lea.vmem [#allocation2], 8
    %v25 = vld [vmem:[%s24] sm:$0xff]
    %s26 = scalar_lea.vmem [#allocation2], 16
    %v27 = vld [vmem:[%s26] sm:$0xff]
    %s28 = scalar_lea.vmem [#allocation2], 24
    %v29 = vld [vmem:[%s28] sm:$0xff]
    %v30 = vmin.f32 %v23, %v27
    %v31 = vmin.f32 %v25, %v29
    %vm32 = vcmp.gt.f32.partialorder %v30, 0.0
    %vm33 = vcmp.gt.f32.partialorder %v31, 0.0
    %vm34 = vmand %vm32, %vm33
    %v35 = vmul.f32 %v30, %v31
    %v36 = vsel %vm34, %v35, 0.0
    %v37 = vmul.f32 %v23, %v25
    %v38 = vmul.f32 %v27, %v29
    %v39 = vadd.f32 %v37, %v38
    %v40 = vsub.f32 %v39, %v36
    %v41 = vadd.f32 %v40, 1e-16
    %v42 = vrcp.pop %v41
    %v43 = vmul.f32 %v36, %v42
    %v44 = vmul.f32 %v43, %v43
    %v45 = vsub.f32 1.0, %v44
    %46 = vst [vmem:[#allocation5] sm:$0xff] %v45
    // Predicated region
    $region10: #{tpu_custom_call.1} parent=1 // pred_check
      _
    $region11: #{tpu_custom_call.1} parent=1 // pred_check_branch
      %48 = sbr.rel (0) target = $region13
    $region12: #{tpu_custom_call.1} parent=1 // pred_region
      %s50 = ssub.s32 128, 128
      %51 = vsyncadd [#allocation4], %s50
      %s53 = sshll.u32 [#allocation5], 4
      %s54 = int_to_ptr.vmem [resolvable:$true] %s53
      %56 = dma.vmem_to_hbm [thread:$0]  %s54, 128, %s1, [#allocation4]
    $region13: #{tpu_custom_call.1} parent=1 // pred_fallthru
      _
    // Predicated region
    $region14: #{tpu_custom_call.1} parent=1 // pred_check
      _
    $region15: #{tpu_custom_call.1} parent=1 // pred_check_branch
      %58 = sbr.rel (0) target = $region17
    $region16: #{tpu_custom_call.1} parent=1 // pred_region
      %59 = dma.done [#allocation4], 128
    $region17: #{tpu_custom_call.1} parent=1 // pred_fallthru
      _
    %60 = vsyncpa [#allocation3], 1
    %61 = vsyncpa [#allocation4], 1

</llo_original>
